<compile_context>
chip_gen: v6e
topology: v6e:2x2x1
jax: 0.10.0
libtpu: 0.0.40
codegen_flags: <defaults>
</compile_context>

<pallas_src>
import functools

import jax
import jax.numpy as jnp
from jax.experimental import pallas as pl
from jax.experimental.pallas import tpu as pltpu


def _scores_kernel(u_ref, enc_ref, scores_ref, *, seq_len, tile_s):
    """u: (1, H); enc: (tile_s, H) natural layout; scores: (1, tile_s) f32."""
    u = u_ref[...]
    enc = enc_ref[...]
    # (1, tile_s) = contract H (last axis of both operands).  Mosaic performs
    # the per-tile rhs transpose in VMEM, overlapped with the next tile's DMA.
    s = jax.lax.dot_general(
        u, enc, (((1,), (1,)), ((), ())), preferred_element_type=jnp.float32)
    # Mask columns past the real sequence length (ragged last tile / grid
    # padding) to -inf so they contribute exp(.) == 0 in phase 2.
    col = pl.program_id(0) * tile_s + jax.lax.broadcasted_iota(
        jnp.int32, s.shape, 1)
    scores_ref[...] = jnp.where(col < seq_len, s, -jnp.inf)


def _softmax_kernel(scores_ref, out_ref):
    """Row softmax over a lane-dense (1, Sp) row; padded entries are -inf."""
    s = scores_ref[...]
    m = jnp.max(s, axis=-1, keepdims=True)
    p = jnp.exp(s - m)
    denom = jnp.sum(p, axis=-1, keepdims=True)
    inv = pl.reciprocal(denom, approx=True)   # EUP slot (otherwise idle)
    inv = inv * (2.0 - denom * inv)           # one Newton step -> ~f32 accurate
    out_ref[...] = p * inv


def _pick_tile_s(hidden_size, itemsize):
    """Sequence-tile (lane) width from a conservative per-buffer VMEM budget.

    ~4 MiB per enc buffer (Pallas double-buffers -> ~8 MiB for the stream),
    which fits v5e's 16 MiB default scoped limit and v7x's 64 MiB physical
    VMEM; capped at 2048 lanes, floored at 128 (>=512 reaches ~85% roofline).
    """
    per_buffer_budget = 4 * 1024 * 1024
    ts = (per_buffer_budget // (hidden_size * itemsize)) // 128 * 128
    return int(max(128, min(2048, ts)))


def attention_example_concat(hidden, encoder_outputs, W, b, other):
    """hidden: (1, H); encoder_outputs: (S, 1, H); W: (H, 2H); b: (H,); other: (1, H).

    Returns softmax attention weights of shape (1, 1, S) (float32), matching
    AttentionExample(method='concat').forward().
    """
    f32 = jnp.float32
    H = hidden.shape[1]
    S = encoder_outputs.shape[0]

    # Encoder outputs stream in natural (S, H) layout and native dtype
    # (no forced f32 upcast; bf16 inputs halve the dominant HBM read).
    enc = encoder_outputs.reshape(S, H)

    # energies_i = other.(W1 @ hidden + b) + (other @ W2) . enc_i.
    # The first term is constant across i and cancels under softmax's shift
    # invariance, so only u = other @ W2 is needed (hidden/W1/b drop out).
    w2 = W.astype(f32)[:, H:]                                # (H, H)
    u = (other.astype(f32) @ w2).astype(enc.dtype)           # (1, H), tiny

    tile_s = _pick_tile_s(H, jnp.dtype(enc.dtype).itemsize)
    if S <= tile_s:
        grid_s, tile_s = 1, S            # single block == full array dims
    else:
        grid_s = pl.cdiv(S, tile_s)      # ragged last enc block is masked
    padded_s = grid_s * tile_s

    # TODO(synk): if the caller evaluates multiple decoder steps / batch
    # elements, batch the query side (u of shape (B, H), B up to 128/256) so
    # the enc HBM stream is amortized and the MXU runs more than one row.

    # Phase 1: lane-dense raw scores, gridded + double-buffered over S.
    scores = pl.pallas_call(
        functools.partial(_scores_kernel, seq_len=S, tile_s=tile_s),
        grid=(grid_s,),
        in_specs=[
            pl.BlockSpec((1, H), lambda s: (0, 0)),        # u: resident
            pl.BlockSpec((tile_s, H), lambda s: (s, 0)),   # enc: streamed
        ],
        out_specs=pl.BlockSpec((1, tile_s), lambda s: (0, s)),
        out_shape=jax.ShapeDtypeStruct((1, padded_s), f32),
        compiler_params=pltpu.CompilerParams(
            dimension_semantics=("parallel",)),   # v7x megacore; no-op on v5e/v6e
    )(u, enc)

    # Phase 2: tiny single-block normalization over the (1, Sp) score row
    # (4*Sp bytes -> fits VMEM even for S ~ 1M).
    # NOTE: requires S >= 1 (an all -inf row would produce NaNs).
    out = pl.pallas_call(
        _softmax_kernel,
        out_shape=jax.ShapeDtypeStruct((1, padded_s), f32),
        in_specs=[pl.BlockSpec(memory_space=pltpu.MemorySpace.VMEM)],
        out_specs=pl.BlockSpec(memory_space=pltpu.MemorySpace.VMEM),
    )(scores)

    return out[:, :S].reshape(1, 1, S)


def _reference(hidden, encoder_outputs, W, b, other):
    S, _, H = encoder_outputs.shape
    enc = encoder_outputs.reshape(S, H).astype(jnp.float32)
    x = jnp.concatenate(
        [jnp.broadcast_to(hidden, (S, H)), enc], axis=1)                # (S, 2H)
    energy = x @ W.T + b                                                # (S, H)
    energies = jnp.sum(energy * other, axis=-1)                         # (S,)
    return jax.nn.softmax(energies).reshape(1, 1, S)


if __name__ == "__main__":
    H = 32   # hidden_size
    S = 8    # seq_len

    key = jax.random.PRNGKey(0)
    k_h, k_e, k_w, k_b, k_o = jax.random.split(key, 5)

    hidden = jax.random.normal(k_h, (1, H), dtype=jnp.float32)
    encoder_outputs = jax.random.normal(k_e, (S, 1, H), dtype=jnp.float32)

    # Deterministic parameter init (nn.Linear(2H, H) weight/bias + 'other').
    W = jax.random.normal(k_w, (H, 2 * H), dtype=jnp.float32) * 0.1
    b = jax.random.normal(k_b, (H,), dtype=jnp.float32) * 0.1
    other = jax.random.normal(k_o, (1, H), dtype=jnp.float32) * 0.1

    out = attention_example_concat(hidden, encoder_outputs, W, b, other)
    out = jax.block_until_ready(out)

    ref = _reference(hidden, encoder_outputs, W, b, other)
    assert out.shape == (1, 1, S)
    assert jnp.allclose(jnp.sum(out), 1.0, atol=1e-5)
    assert jnp.allclose(out, ref, atol=1e-5, rtol=1e-5)

    print("KERNEL_OK")
</pallas_src>

<mosaic_0001>
module attributes {stable_mosaic.version = 11 : i64} {
  func.func @_scores_kernel(%arg0: i32, %arg1: memref<1x32xf32, #tpu.memory_space<vmem>>, %arg2: memref<8x32xf32, #tpu.memory_space<vmem>>, %arg3: memref<1x8xf32, #tpu.memory_space<vmem>>) attributes {dimension_semantics = [#tpu.dimension_semantics<parallel>], iteration_bounds = array<i64: 1>, scalar_prefetch = 0 : i64, scratch_operands = 0 : i64, tpu.core_type = #tpu.core_type<tc>, window_params = [{pipeline_mode = #tpu.pipeline_mode<synchronous>, transform_indices = @transform_0, window_bounds = array<i64: 1, 32>}, {transform_indices = @transform_1, window_bounds = array<i64: 8, 32>}, {transform_indices = @transform_2, window_bounds = array<i64: 1, 8>}]} {
    %c0 = arith.constant 0 : index
    %c0_0 = arith.constant 0 : index
    %0 = vector.load %arg1[%c0, %c0_0] : memref<1x32xf32, #tpu.memory_space<vmem>>, vector<1x32xf32>
    %c0_1 = arith.constant 0 : index
    %c0_2 = arith.constant 0 : index
    %1 = vector.load %arg2[%c0_1, %c0_2] : memref<8x32xf32, #tpu.memory_space<vmem>>, vector<8x32xf32>
    %cst = arith.constant dense<0.000000e+00> : vector<1x8xf32>
    %2 = tpu.matmul %0, %1, %cst {dimension_numbers = #tpu.dot_dimension_numbers<[1], [1], [0], [0], [0, 0, 1, 0], [], []>} : vector<1x32xf32>, vector<8x32xf32>, vector<1x8xf32> -> vector<1x8xf32>
    %c8_i32 = arith.constant 8 : i32
    %3 = arith.muli %arg0, %c8_i32 : i32
    %4 = tpu.iota {dimensions = array<i32: 1>} : vector<1x8xi32>
    %5 = vector.broadcast %3 : i32 to vector<1x8xi32>
    %6 = arith.addi %5, %4 : vector<1x8xi32>
    %c8_i32_3 = arith.constant 8 : i32
    %7 = vector.broadcast %c8_i32_3 : i32 to vector<1x8xi32>
    %8 = arith.cmpi slt, %6, %7 : vector<1x8xi32>
    %cst_4 = arith.constant 0xFF800000 : f32
    %9 = vector.broadcast %cst_4 : f32 to vector<1x8xf32>
    %10 = arith.select %8, %2, %9 : vector<1x8xi1>, vector<1x8xf32>
    %c0_5 = arith.constant 0 : index
    %c0_6 = arith.constant 0 : index
    %11 = vector.load %arg3[%c0_5, %c0_6] : memref<1x8xf32, #tpu.memory_space<vmem>>, vector<1x8xf32>
    tpu.vector_store %arg3[%c0_5, %c0_6], %10 {strides = array<i32>} : memref<1x8xf32, #tpu.memory_space<vmem>>, vector<1x8xf32>,
    return
  }
  func.func @transform_0(%arg0: i32) -> (i32, i32) {
    %c0_i32 = arith.constant 0 : i32
    %c0_i32_0 = arith.constant 0 : i32
    %c0_i32_1 = arith.constant 0 : i32
    return %c0_i32, %c0_i32_0 : i32, i32
  }
  func.func @transform_1(%arg0: i32) -> (i32, i32) {
    %c0_i32 = arith.constant 0 : i32
    %c0_i32_0 = arith.constant 0 : i32
    return %arg0, %c0_i32 : i32, i32
  }
  func.func @transform_2(%arg0: i32) -> (i32, i32) {
    %c0_i32 = arith.constant 0 : i32
    %c0_i32_0 = arith.constant 0 : i32
    return %c0_i32, %arg0 : i32, i32
  }
}

</mosaic_0001>

<llo_original>
// kernel: tpu_custom_call.1
$region0: #{tpu_custom_call.1}
  #allocation0 [shape = 'u32[]', space=smem, size = 0x4, offset = 0x4, fixed_abs, tag = 'smem constant byte address 0x4 - core index']
  #allocation1 [shape = 'u32[144,128]{1,0:T(1,128)}', space=vmem, size = 0x12000, scoped, tag = 'internal scratch']
  %s0 = inlined_call_operand.hbm [shape: f32[1,32], index: 0, kind: input, shape index: {}]
  %s1 = inlined_call_operand.hbm [shape: f32[8,32], index: 1, kind: input, shape index: {}]
  %s2 = inlined_call_operand.hbm [shape: f32[1,8], index: 2, kind: output, shape index: {}]
  %s3 = sld [smem:[#allocation0]]
  $region26: #{tpu_custom_call.1} parent=0
    _
  %s5 = ssub.s32 1, %s3
  %s6 = scalar_select 0, %s5, %s3
  $region1: #{tpu_custom_call.1} parent=0
    #allocation2 [shape = 'u8[512]{0}', space=vmem, size = 0x400, scoped, tag = 'input window, operand 0, single buffered']
    #allocation3 [shape = 's32[1]{0}', space=sflag, size = 0x4, scoped, tag = 'scoped memory for tpu_custom_call.1']
    #allocation4 [shape = 's32[1]{0}', space=sflag, size = 0x4, scoped, tag = 'scoped memory for tpu_custom_call.1']
    #allocation5 [shape = 'u8[4096]{0}', space=vmem, size = 0x1000, scoped, tag = 'input window, operand 1, single buffered']
    #allocation6 [shape = 's32[1]{0}', space=sflag, size = 0x4, scoped, tag = 'scoped memory for tpu_custom_call.1']
    #allocation7 [shape = 'u8[512]{0}', space=vmem, size = 0x400, scoped, tag = 'output window, operand 0, single buffered']
    %7 = vsyncpa [#allocation3], 0
    %8 = vsyncpa [#allocation6], 0
    %9 = vsyncpa [#allocation4], 0
    // Predicated region
    $region2: #{tpu_custom_call.1} parent=1 // pred_check
      _
    $region3: #{tpu_custom_call.1} parent=1 // pred_check_branch
      %11 = sbr.rel (0) target = $region5
    $region4: #{tpu_custom_call.1} parent=1 // pred_region
      %s13 = ssub.s32 16, 16
      %14 = vsyncadd [#allocation3], %s13
      %s16 = sshll.u32 [#allocation2], 4
      %s17 = int_to_ptr.vmem [resolvable:$true] %s16
      %19 = dma.hbm_to_vmem [thread:$0]  %s0, 16, %s17, [#allocation3]
    $region5: #{tpu_custom_call.1} parent=1 // pred_fallthru
      _
    // Predicated region
    $region6: #{tpu_custom_call.1} parent=1 // pred_check
      _
    $region7: #{tpu_custom_call.1} parent=1 // pred_check_branch
      %21 = sbr.rel (0) target = $region9
    $region8: #{tpu_custom_call.1} parent=1 // pred_region
      %s23 = ssub.s32 128, 128
      %24 = vsyncadd [#allocation6], %s23
      %s26 = sshll.u32 [#allocation5], 4
      %s27 = int_to_ptr.vmem [resolvable:$true] %s26
      %29 = dma.hbm_to_vmem [thread:$0]  %s1, 128, %s27, [#allocation6]
    $region9: #{tpu_custom_call.1} parent=1 // pred_fallthru
      _
    // Predicated region
    $region10: #{tpu_custom_call.1} parent=1 // pred_check
      _
    $region11: #{tpu_custom_call.1} parent=1 // pred_check_branch
      %31 = sbr.rel (0) target = $region13
    $region12: #{tpu_custom_call.1} parent=1 // pred_region
      %32 = dma.done [#allocation3], 16
    $region13: #{tpu_custom_call.1} parent=1 // pred_fallthru
      _
    // Predicated region
    $region14: #{tpu_custom_call.1} parent=1 // pred_check
      _
    $region15: #{tpu_custom_call.1} parent=1 // pred_check_branch
      %34 = sbr.rel (0) target = $region17
    $region16: #{tpu_custom_call.1} parent=1 // pred_region
      %35 = dma.done [#allocation6], 128
    $region17: #{tpu_custom_call.1} parent=1 // pred_fallthru
      _
    %v36 = vld [vmem:[#allocation2] sm:$0x1]
    %v37 = vld [vmem:[#allocation5] sm:$0xff]
    %vm38 = vcmask 261120
    %v40 = vsel %vm38, %v36, 0
    %v43 = vsel %vm38, %v37, 0
    %45 = vmatprep.subr.mxu0 0.0
    %46 = vmatpush1.xpose.msra.mxu0 0.0
    %47 = vmatprep.subr.mxu0 0.0
    %48 = vmatpush1.xpose.msra.mxu0 0.0
    %49 = vmatprep.subr.mxu0 0.0
    %50 = vmatpush1.xpose.msra.mxu0 0.0
    %51 = vmatprep.subr.mxu0 0.0
    %52 = vmatpush1.xpose.msra.mxu0 0.0
    %53 = vmatprep.subr.mxu0 0.0
    %54 = vmatpush1.xpose.msra.mxu0 0.0
    %55 = vmatprep.subr.mxu0 0.0
    %56 = vmatpush1.xpose.msra.mxu0 0.0
    %57 = vmatprep.subr.mxu0 0.0
    %58 = vmatpush1.xpose.msra.mxu0 0.0
    %59 = vmatprep.subr.mxu0 0.0
    %60 = vmatpush1.xpose.msra.mxu0 0.0
    %61 = vmatprep.subr.mxu0 0.0
    %62 = vmatpush1.xpose.msra.mxu0 0.0
    %63 = vmatprep.subr.mxu0 0.0
    %64 = vmatpush1.xpose.msra.mxu0 0.0
    %65 = vmatprep.subr.mxu0 0.0
    %66 = vmatpush1.xpose.msra.mxu0 0.0
    %67 = vmatprep.subr.mxu0 0.0
    %68 = vmatpush1.xpose.msra.mxu0 0.0
    %69 = vmatprep.subr.mxu0 0.0
    %70 = vmatpush1.xpose.msra.mxu0 0.0
    %71 = vmatprep.subr.mxu0 0.0
    %72 = vmatpush1.xpose.msra.mxu0 0.0
    %73 = vmatprep.subr.mxu0 0.0
    %74 = vmatpush1.xpose.msra.mxu0 0.0
    %75 = vmatprep.subr.mxu0 0.0
    %76 = vmatpush1.xpose.msra.mxu0 %v43
    %77 = vmatprep.subr.mxu0 0.0
    %78 = vmatpush2.xpose.msra.mxu0 0.0
    %79 = vmatprep.subr.mxu0 0.0
    %80 = vmatpush2.xpose.msra.mxu0 0.0
    %81 = vmatprep.subr.mxu0 0.0
    %82 = vmatpush2.xpose.msra.mxu0 0.0
    %83 = vmatprep.subr.mxu0 0.0
    %84 = vmatpush2.xpose.msra.mxu0 0.0
    %85 = vmatprep.subr.mxu0 0.0
    %86 = vmatpush2.xpose.msra.mxu0 0.0
    %87 = vmatprep.subr.mxu0 0.0
    %88 = vmatpush2.xpose.msra.mxu0 0.0
    %89 = vmatprep.subr.mxu0 0.0
    %90 = vmatpush2.xpose.msra.mxu0 0.0
    %91 = vmatprep.subr.mxu0 0.0
    %92 = vmatpush2.xpose.msra.mxu0 0.0
    %93 = vmatprep.subr.mxu0 0.0
    %94 = vmatpush2.xpose.msra.mxu0 0.0
    %95 = vmatprep.subr.mxu0 0.0
    %96 = vmatpush2.xpose.msra.mxu0 0.0
    %97 = vmatprep.subr.mxu0 0.0
    %98 = vmatpush2.xpose.msra.mxu0 0.0
    %99 = vmatprep.subr.mxu0 0.0
    %100 = vmatpush2.xpose.msra.mxu0 0.0
    %101 = vmatprep.subr.mxu0 0.0
    %102 = vmatpush2.xpose.msra.mxu0 0.0
    %103 = vmatprep.subr.mxu0 0.0
    %104 = vmatpush2.xpose.msra.mxu0 0.0
    %105 = vmatprep.subr.mxu0 0.0
    %106 = vmatpush2.xpose.msra.mxu0 0.0
    %107 = vmatprep.subr.mxu0 0.0
    %108 = vmatpush2.xpose.msra.mxu0 0.0
    %109 = vmatprep.mubr.f32.mxu0 0.0
    %110 = vmatmul.mubr.f32.gmra.mxu0 %v40
    %v111 = vpop.f32.mrf.mxu0
    %v112 = vadd.f32 0.0, %v111
    %v113 = vpop.f32.mrf.mxu0
    %114 = vdwg.mxu0
    %s115 = smul.u32 0, 8
    %v116 = vlaneseq
    %v117 = vand.u32 %v116, 127
    %v118 = vstv %s115
    %v119 = vadd.s32 %v118, %v117
    %vm120 = vcmp.lt.s32.totalorder %v119, 8
    %v121 = vsel %vm120, %v112, -inf
    %vm122 = vcmask 57344
    %123 = vst.msk [vmem:[#allocation7] sm:$0x1] %vm122, %v121
    // Predicated region
    $region18: #{tpu_custom_call.1} parent=1 // pred_check
      _
    $region19: #{tpu_custom_call.1} parent=1 // pred_check_branch
      %125 = sbr.rel (0) target = $region21
    $region20: #{tpu_custom_call.1} parent=1 // pred_region
      %s127 = ssub.s32 16, 16
      %128 = vsyncadd [#allocation4], %s127
      %s130 = sshll.u32 [#allocation7], 4
      %s131 = int_to_ptr.vmem [resolvable:$true] %s130
      %133 = dma.vmem_to_hbm [thread:$0]  %s131, 16, %s2, [#allocation4]
    $region21: #{tpu_custom_call.1} parent=1 // pred_fallthru
      _
    // Predicated region
    $region22: #{tpu_custom_call.1} parent=1 // pred_check
      _
    $region23: #{tpu_custom_call.1} parent=1 // pred_check_branch
      %135 = sbr.rel (0) target = $region25
    $region24: #{tpu_custom_call.1} parent=1 // pred_region
      %136 = dma.done [#allocation4], 16
    $region25: #{tpu_custom_call.1} parent=1 // pred_fallthru
      _
    %137 = vsyncpa [#allocation3], 1
    %138 = vsyncpa [#allocation6], 1
    %139 = vsyncpa [#allocation4], 1

</llo_original>
